<compile_context>
chip_gen: v5e
topology: v5e:2x2
jax: 0.10.0
libtpu: 0.0.40
codegen_flags: <defaults>
</compile_context>

<pallas_src>
import functools

import jax
import jax.numpy as jnp
from jax.experimental import pallas as pl
from jax.experimental.pallas import tpu as pltpu


def _proj_head_kernel(x_ref, w1_ref, shift_ref, w2_ref, o_ref):
    # x_ref:     (Cin, T)   spatial tile; channels on sublanes, pixels on lanes
    # w1_ref:    (Cin, Cin) conv1 weight, PyTorch [out, in] layout, BN scale folded
    # shift_ref: (Cin, 1)   folded BN shift (f32)
    # w2_ref:    (Cp, Cin)  conv2 weight, PyTorch [out, in] layout
    # o_ref:     (Cp, T)    l2-normalized output tile
    # conv1 (1x1, no bias) with folded BN scale -> MXU, f32 accumulation.
    h = jnp.dot(w1_ref[...], x_ref[...], preferred_element_type=jnp.float32)
    # BN shift + ReLU in f32 (VPU).
    h = jnp.maximum(h + shift_ref[...], 0.0)
    # conv2 (1x1, no bias); feed the MXU in the weight dtype (bf16 on v6e/v7x).
    y = jnp.dot(w2_ref[...], h.astype(w2_ref.dtype),
                preferred_element_type=jnp.float32)
    # F.normalize(y, p=2, dim=channel): y / max(||y||, 1e-12)
    #   == y * rsqrt(max(||y||^2, 1e-24));  rsqrt runs on the EUP slot.
    sq = jnp.sum(y * y, axis=0, keepdims=True)          # cross-sublane reduce (XLU)
    inv = jax.lax.rsqrt(jnp.maximum(sq, 1e-24))
    o_ref[...] = (y * inv).astype(o_ref.dtype)


def _pick_tile_hw(hw, cin, cproj, itemsize, max_tile_hw):
    """Spatial tile: a multiple of 128 lanes, as big as the VMEM budget allows.

    Large tiles (512-1024) are where mem-bound kernels reach ~85% of HBM
    roofline (0.35us/step pipeline overhead amortized).  Budget targets the
    32 MiB default scoped VMEM, which is also safe on v7x (64 MiB physical).
    """
    hw128 = ((hw + 127) // 128) * 128
    tile = max(128, min((max_tile_hw // 128) * 128, hw128))

    weights = (cin * cin + cproj * cin) * itemsize + cin * 4  # single resident copy

    def vmem_bytes(t):
        x_tiles = 2 * cin * t * itemsize      # double-buffered input tile
        o_tiles = 2 * cproj * t * 4           # double-buffered output tile
        tmp = (cin + cproj) * t * 4           # in-kernel h / y f32 temporaries
        return weights + x_tiles + o_tiles + tmp

    budget = 24 * 1024 * 1024
    while tile > 128 and vmem_bytes(tile) > budget:
        tile -= 128
    return tile


@functools.partial(jax.jit, static_argnames=("compute_dtype", "max_tile_hw"))
def projection_head_forward(x_nchw, w1, bn_gamma, bn_beta, bn_mean, bn_var, w2,
                            *, compute_dtype=jnp.float32, max_tile_hw=1024):
    """ProjectionHead (convmlp) forward.

    Args:
      x_nchw: [B, Cin, H, W] feature map.
      w1:     [Cin, Cin]   first 1x1 conv weight, PyTorch [out, in] layout.
      bn_*:   [Cin]        BatchNorm2d affine params + running stats (eval mode).
      w2:     [Cproj, Cin] second 1x1 conv weight, PyTorch [out, in] layout.
      compute_dtype: dtype fed to the MXU (use jnp.bfloat16 on v6e/v7x for
        ~2x matmul throughput and half the x/W HBM traffic); accumulation and
        all elementwise math stay in f32.
    Returns: [B, Cproj, H, W], l2-normalized over the channel axis.
    """
    B, Cin, H, W = x_nchw.shape
    Cproj = w2.shape[0]
    out_dtype = x_nchw.dtype
    eps = 1e-5  # nn.BatchNorm2d default

    # Fold eval-mode BN into the first conv:  BN(W1 @ x) = (scale*W1) @ x + shift.
    inv_std = 1.0 / jnp.sqrt(bn_var.astype(jnp.float32) + eps)
    scale = bn_gamma.astype(jnp.float32) * inv_std                      # [Cin]
    shift = bn_beta.astype(jnp.float32) - bn_mean.astype(jnp.float32) * scale
    w1_f = (w1.astype(jnp.float32) * scale[:, None]).astype(compute_dtype)
    w2_c = w2.astype(compute_dtype)
    shift = shift.reshape(Cin, 1)                                       # stays f32

    # NCHW -> [B, Cin, HW]: a free reshape, NO transpose.
    HW = H * W
    x3 = x_nchw.reshape(B, Cin, HW).astype(compute_dtype)

    itemsize = jnp.dtype(compute_dtype).itemsize
    tile_hw = _pick_tile_hw(HW, Cin, Cproj, itemsize, max_tile_hw)
    HW_pad = ((HW + tile_hw - 1) // tile_hw) * tile_hw
    if HW_pad != HW:
        x3 = jnp.pad(x3, ((0, 0), (0, 0), (0, HW_pad - HW)))

    # Grid: (batch, spatial tiles) -- both independent -> "parallel" so Mosaic
    # can shard steps across TensorCores (v7x has 2 TCs/chip).
    grid = (B, HW_pad // tile_hw)

    # Grid-invariant operands live fully in VMEM for the whole kernel:
    # one copy, no per-step DMA, no double-buffering.
    resident = pl.BlockSpec(memory_space=pltpu.MemorySpace.VMEM)
    # TODO(synk): for very large Cin (W1 of tens of MiB) stream W1 with a
    #             K-tiled "arbitrary" grid axis instead of keeping it resident.

    out = pl.pallas_call(
        _proj_head_kernel,
        out_shape=jax.ShapeDtypeStruct((B, Cproj, HW_pad), out_dtype),
        grid_spec=pltpu.PrefetchScalarGridSpec(
            num_scalar_prefetch=0,
            grid=grid,
            in_specs=[
                pl.BlockSpec((None, Cin, tile_hw), lambda b, s: (b, 0, s)),  # x tile
                resident,                                                    # W1 (BN scale folded)
                resident,                                                    # BN shift
                resident,                                                    # W2
            ],
            out_specs=pl.BlockSpec((None, Cproj, tile_hw), lambda b, s: (b, 0, s)),
        ),
        compiler_params=pltpu.CompilerParams(
            dimension_semantics=("parallel", "parallel"),
            vmem_limit_bytes=32 * 1024 * 1024,
        ),
    )(x3, w1_f, shift, w2_c)

    if HW_pad != HW:
        out = out[:, :, :HW]
    return out.reshape(B, Cproj, H, W)


def _reference_forward(x_nchw, w1, bn_gamma, bn_beta, bn_mean, bn_var, w2):
    """Pure-JAX reference (eval-mode BN), PyTorch-layout weights [out, in]."""
    eps = 1e-5
    x = x_nchw.astype(jnp.float32)
    hi = jax.lax.Precision.HIGHEST
    h = jnp.einsum("oc,bchw->bohw", w1, x, precision=hi)
    h = ((h - bn_mean[None, :, None, None])
         / jnp.sqrt(bn_var + eps)[None, :, None, None]
         * bn_gamma[None, :, None, None]
         + bn_beta[None, :, None, None])
    h = jnp.maximum(h, 0.0)
    y = jnp.einsum("oc,bchw->bohw", w2, h, precision=hi)
    denom = jnp.maximum(jnp.sqrt(jnp.sum(y * y, axis=1, keepdims=True)), 1e-12)
    return y / denom


if __name__ == "__main__":
    # Small, deterministic setup.
    B, Cin, H, W = 2, 32, 16, 16
    Cproj = 64

    key = jax.random.PRNGKey(0)
    k_x, k_w1, k_w2, k_g, k_b = jax.random.split(key, 5)

    x = jax.random.normal(k_x, (B, Cin, H, W), dtype=jnp.float32)
    # Conv weights in PyTorch layout [Cout, Cin] (1x1 spatial dims squeezed).
    w1 = jax.random.normal(k_w1, (Cin, Cin), dtype=jnp.float32) * 0.05
    w2 = jax.random.normal(k_w2, (Cproj, Cin), dtype=jnp.float32) * 0.05

    # BatchNorm2d parameters / running stats (eval mode).
    bn_gamma = 1.0 + 0.1 * jax.random.normal(k_g, (Cin,), dtype=jnp.float32)
    bn_beta = 0.1 * jax.random.normal(k_b, (Cin,), dtype=jnp.float32)
    bn_mean = jnp.zeros((Cin,), dtype=jnp.float32)
    bn_var = jnp.ones((Cin,), dtype=jnp.float32)

    ref = _reference_forward(x, w1, bn_gamma, bn_beta, bn_mean, bn_var, w2)

    # f32 MXU path -- strict correctness check.
    out = projection_head_forward(x, w1, bn_gamma, bn_beta, bn_mean, bn_var, w2)
    out = jax.block_until_ready(out)
    assert out.shape == (B, Cproj, H, W), out.shape
    assert jnp.allclose(out, ref, atol=1e-5, rtol=1e-5), "f32 mismatch vs reference"

    # bf16 MXU path (v6e/v7x perf path) -- looser tolerance vs the f32 reference.
    out_bf16 = projection_head_forward(x, w1, bn_gamma, bn_beta, bn_mean, bn_var,
                                       w2, compute_dtype=jnp.bfloat16)
    out_bf16 = jax.block_until_ready(out_bf16)
    assert out_bf16.shape == (B, Cproj, H, W), out_bf16.shape
    assert jnp.allclose(out_bf16, ref, atol=5e-2), "bf16 mismatch vs reference"

    print("KERNEL_OK")
</pallas_src>

<mosaic_0001>
module attributes {stable_mosaic.version = 11 : i64} {
  func.func @_proj_head_kernel(%arg0: i32, %arg1: i32, %arg2: memref<1x32x256xf32, #tpu.memory_space<vmem>>, %arg3: memref<32x32xf32, #tpu.memory_space<vmem>>, %arg4: memref<32x1xf32, #tpu.memory_space<vmem>>, %arg5: memref<64x32xf32, #tpu.memory_space<vmem>>, %arg6: memref<1x64x256xf32, #tpu.memory_space<vmem>>) attributes {dimension_semantics = [#tpu.dimension_semantics<parallel>, #tpu.dimension_semantics<parallel>], iteration_bounds = array<i64: 2, 1>, scalar_prefetch = 0 : i64, scratch_operands = 0 : i64, tpu.core_type = #tpu.core_type<tc>, window_params = [{transform_indices = @transform_0, window_bounds = array<i64: 1, 32, 256>}, {pipeline_mode = #tpu.pipeline_mode<synchronous>, transform_indices = @transform_1, window_bounds = array<i64: 32, 32>}, {pipeline_mode = #tpu.pipeline_mode<synchronous>, transform_indices = @transform_2, window_bounds = array<i64: 32, 1>}, {pipeline_mode = #tpu.pipeline_mode<synchronous>, transform_indices = @transform_3, window_bounds = array<i64: 64, 32>}, {transform_indices = @transform_4, window_bounds = array<i64: 1, 64, 256>}]} {
    %c0 = arith.constant 0 : index
    %c0_0 = arith.constant 0 : index
    %0 = vector.load %arg3[%c0, %c0_0] : memref<32x32xf32, #tpu.memory_space<vmem>>, vector<32x32xf32>
    %c0_1 = arith.constant 0 : index
    %c0_2 = arith.constant 0 : index
    %c0_3 = arith.constant 0 : index
    %1 = vector.load %arg2[%c0_1, %c0_2, %c0_3] : memref<1x32x256xf32, #tpu.memory_space<vmem>>, vector<1x32x256xf32>
    %2 = vector.shape_cast %1 : vector<1x32x256xf32> to vector<32x256xf32>
    %cst = arith.constant dense<0.000000e+00> : vector<32x256xf32>
    %3 = tpu.matmul %0, %2, %cst {dimension_numbers = #tpu.dot_dimension_numbers<[1], [0], [0], [1], [0, 0, 1, 1], [], []>} : vector<32x32xf32>, vector<32x256xf32>, vector<32x256xf32> -> vector<32x256xf32>
    %c0_4 = arith.constant 0 : index
    %c0_5 = arith.constant 0 : index
    %4 = vector.load %arg4[%c0_4, %c0_5] : memref<32x1xf32, #tpu.memory_space<vmem>>, vector<32x1xf32>
    %5 = vector.broadcast %4 : vector<32x1xf32> to vector<32x256xf32>
    %6 = arith.addf %3, %5 : vector<32x256xf32>
    %cst_6 = arith.constant 0.000000e+00 : f32
    %7 = vector.broadcast %cst_6 : f32 to vector<32x256xf32>
    %8 = arith.maximumf %6, %7 : vector<32x256xf32>
    %c0_7 = arith.constant 0 : index
    %c0_8 = arith.constant 0 : index
    %9 = vector.load %arg5[%c0_7, %c0_8] : memref<64x32xf32, #tpu.memory_space<vmem>>, vector<64x32xf32>
    %cst_9 = arith.constant dense<0.000000e+00> : vector<64x256xf32>
    %10 = tpu.matmul %9, %8, %cst_9 {dimension_numbers = #tpu.dot_dimension_numbers<[1], [0], [0], [1], [0, 0, 1, 1], [], []>} : vector<64x32xf32>, vector<32x256xf32>, vector<64x256xf32> -> vector<64x256xf32>
    %11 = arith.mulf %10, %10 : vector<64x256xf32>
    %cst_10 = arith.constant dense<0.000000e+00> : vector<256xf32>
    %12 = vector.multi_reduction <add>, %11, %cst_10 [0] : vector<64x256xf32> to vector<256xf32>
    %13 = vector.shape_cast %12 : vector<256xf32> to vector<1x256xf32>
    %cst_11 = arith.constant 1.000000e-24 : f32
    %14 = vector.broadcast %cst_11 : f32 to vector<1x256xf32>
    %15 = arith.maximumf %13, %14 : vector<1x256xf32>
    %16 = math.rsqrt %15 : vector<1x256xf32>
    %17 = vector.broadcast %16 : vector<1x256xf32> to vector<64x256xf32>
    %18 = arith.mulf %10, %17 : vector<64x256xf32>
    %c0_12 = arith.constant 0 : index
    %c0_13 = arith.constant 0 : index
    %c0_14 = arith.constant 0 : index
    %19 = vector.load %arg6[%c0_12, %c0_13, %c0_14] : memref<1x64x256xf32, #tpu.memory_space<vmem>>, vector<1x64x256xf32>
    %20 = vector.shape_cast %19 : vector<1x64x256xf32> to vector<64x256xf32>
    %21 = vector.shape_cast %18 : vector<64x256xf32> to vector<1x64x256xf32>
    tpu.vector_store %arg6[%c0_12, %c0_13, %c0_14], %21 {strides = array<i32>} : memref<1x64x256xf32, #tpu.memory_space<vmem>>, vector<1x64x256xf32>,
    return
  }
  func.func @transform_0(%arg0: i32, %arg1: i32) -> (i32, i32, i32) {
    %c0_i32 = arith.constant 0 : i32
    %c0_i32_0 = arith.constant 0 : i32
    return %arg0, %c0_i32, %arg1 : i32, i32, i32
  }
  func.func @transform_1(%arg0: i32, %arg1: i32) -> (i32, i32) {
    %c0_i32 = arith.constant 0 : i32
    %c0_i32_0 = arith.constant 0 : i32
    %c0_i32_1 = arith.constant 0 : i32
    return %c0_i32, %c0_i32_0 : i32, i32
  }
  func.func @transform_2(%arg0: i32, %arg1: i32) -> (i32, i32) {
    %c0_i32 = arith.constant 0 : i32
    %c0_i32_0 = arith.constant 0 : i32
    %c0_i32_1 = arith.constant 0 : i32
    return %c0_i32, %c0_i32_0 : i32, i32
  }
  func.func @transform_3(%arg0: i32, %arg1: i32) -> (i32, i32) {
    %c0_i32 = arith.constant 0 : i32
    %c0_i32_0 = arith.constant 0 : i32
    %c0_i32_1 = arith.constant 0 : i32
    return %c0_i32, %c0_i32_0 : i32, i32
  }
  func.func @transform_4(%arg0: i32, %arg1: i32) -> (i32, i32, i32) {
    %c0_i32 = arith.constant 0 : i32
    %c0_i32_0 = arith.constant 0 : i32
    return %arg0, %c0_i32, %arg1 : i32, i32, i32
  }
}

</mosaic_0001>

<llo_original>
// kernel: projection_head_forward.1
$region0: #{projection_head_forward.1}
  #allocation0 [shape = 'u32[]', space=smem, size = 0x4, offset = 0x4, fixed_abs, tag = 'smem constant byte address 0x4 - core index']
  #allocation1 [shape = 'u32[72,128]{1,0:T(1,128)}', space=vmem, size = 0x9000, scoped, tag = 'internal scratch']
  %s0 = inlined_call_operand.vmem [shape: f32[2,32,256], index: 0, kind: input, shape index: {}]
  %s1 = inlined_call_operand.vmem [shape: f32[32,32], index: 1, kind: input, shape index: {}]
  %s2 = inlined_call_operand.vmem [shape: f32[32,1], index: 2, kind: input, shape index: {}]
  %s3 = inlined_call_operand.vmem [shape: f32[64,32], index: 3, kind: input, shape index: {}]
  %s4 = inlined_call_operand.vmem [shape: f32[2,64,256], index: 4, kind: output, shape index: {}]
  %s5 = sld [smem:[#allocation0]]
  $region49: #{projection_head_forward.1} parent=0
    _
  %s7 = ssub.s32 1, %s5
  %s8 = scalar_select 0, %s7, %s5
  loop: start=0, step=1, limit=4
  $region2: #{projection_head_forward.1} parent=0 // loop_pre_header
    _
  $region3: #{projection_head_forward.1} parent=0 // loop_header
    %s10 = sphi 0, %s14
    %p11 = scmp.ge.s32.totalorder %s10, 4
    %s17 = sphi 0, %s29
    %s18 = sphi 0, %s25
    %s19 = sphi 0, %s17
    %s20 = sphi 0, %s18
    %s21 = sphi 0, %s19
    %s22 = sphi 0, %s20
    %s34 = sphi 0, %s36
    %s37 = sphi 0, %s34
    %s38 = sphi 0, %s37
    %s54 = sphi 0, %s38
    %s58 = sphi 0, %s58
    %s60 = sphi 0, %s58
    %s61 = sphi 0, %s60
    %s75 = sphi 0, %s61
    %s79 = sphi 0, %s79
    %s81 = sphi 0, %s79
    %s82 = sphi 0, %s81
    %s96 = sphi 0, %s82
    %s100 = sphi 0, %s100
    %s102 = sphi 0, %s100
    %s103 = sphi 0, %s102
    %s117 = sphi 0, %s103
    %s125 = sphi 0, %s127
    %s128 = sphi 0, %s125
    %s129 = sphi 0, %s128
    %s145 = sphi 0, %s129
  $region4: #{projection_head_forward.1} parent=0 // loop_header_branch
    %13 = sbr.rel (%p11) target = $region8
  $region5: #{projection_head_forward.1} parent=0 // loop_body
    %s15 = ssub.s32 %s10, 1
    %s16 = ssub.s32 %s10, 2
    %s23 = sadd.s32 1, %s18
    %p24 = scmp.ge.s32.totalorder %s23, 1
    %s25 = scalar_select %p24, 0, %s23
    %s26 = sadd.s32 1, %s17
    %s27 = scalar_select %p24, %s26, %s17
    %p28 = scmp.ge.s32.totalorder %s27, 2
    %s29 = scalar_select %p28, 0, %s27
    %s30 = ssub.s32 %s17, %s29
    %s31 = ssub.s32 %s18, %s25
    %s32 = sor.u32 %s30, %s31
    %p33 = scmp.eq.s32.totalorder %s32, 0
    %s35 = sadd.s32 %s34, 1
    %s36 = scalar_select %p33, %s34, %s35
    %p39 = pneg %p33
    %p40 = scmp.eq.s32.totalorder %s10, 1
    %p41 = por %p39, %p40
    %p42 = scmp.ne.s32.totalorder %s34, %s37
    %p43 = scmp.eq.s32.totalorder %s10, 0
    %p44 = por %p42, %p43
    %p45 = scmp.ne.s32.totalorder %s34, %s37
    %p46 = scmp.eq.s32.totalorder %s15, 1
    %p47 = por %p45, %p46
    %p48 = scmp.ne.s32.totalorder %s37, %s38
    %p49 = scmp.eq.s32.totalorder %s15, 0
    %p50 = por %p48, %p49
    %p51 = scmp.ne.s32.totalorder %s37, %s38
    %p52 = scmp.eq.s32.totalorder %s16, 1
    %p53 = por %p51, %p52
    %p55 = scmp.ne.s32.totalorder %s38, %s54
    %p56 = scmp.eq.s32.totalorder %s16, 0
    %p57 = por %p55, %p56
    %s59 = sadd.s32 %s58, 1
    %p62 = scmp.eq.s32.totalorder %s10, 1
    %p63 = scmp.ne.s32.totalorder %s58, %s60
    %p64 = scmp.eq.s32.totalorder %s10, 0
    %p65 = por %p63, %p64
    %p66 = scmp.ne.s32.totalorder %s58, %s60
    %p67 = scmp.eq.s32.totalorder %s15, 1
    %p68 = por %p66, %p67
    %p69 = scmp.ne.s32.totalorder %s60, %s61
    %p70 = scmp.eq.s32.totalorder %s15, 0
    %p71 = por %p69, %p70
    %p72 = scmp.ne.s32.totalorder %s60, %s61
    %p73 = scmp.eq.s32.totalorder %s16, 1
    %p74 = por %p72, %p73
    %p76 = scmp.ne.s32.totalorder %s61, %s75
    %p77 = scmp.eq.s32.totalorder %s16, 0
    %p78 = por %p76, %p77
    %s80 = sadd.s32 %s79, 1
    %p83 = scmp.eq.s32.totalorder %s10, 1
    %p84 = scmp.ne.s32.totalorder %s79, %s81
    %p85 = scmp.eq.s32.totalorder %s10, 0
    %p86 = por %p84, %p85
    %p87 = scmp.ne.s32.totalorder %s79, %s81
    %p88 = scmp.eq.s32.totalorder %s15, 1
    %p89 = por %p87, %p88
    %p90 = scmp.ne.s32.totalorder %s81, %s82
    %p91 = scmp.eq.s32.totalorder %s15, 0
    %p92 = por %p90, %p91
    %p93 = scmp.ne.s32.totalorder %s81, %s82
    %p94 = scmp.eq.s32.totalorder %s16, 1
    %p95 = por %p93, %p94
    %p97 = scmp.ne.s32.totalorder %s82, %s96
    %p98 = scmp.eq.s32.totalorder %s16, 0
    %p99 = por %p97, %p98
    %s101 = sadd.s32 %s100, 1
    %p104 = scmp.eq.s32.totalorder %s10, 1
    %p105 = scmp.ne.s32.totalorder %s100, %s102
    %p106 = scmp.eq.s32.totalorder %s10, 0
    %p107 = por %p105, %p106
    %p108 = scmp.ne.s32.totalorder %s100, %s102
    %p109 = scmp.eq.s32.totalorder %s15, 1
    %p110 = por %p108, %p109
    %p111 = scmp.ne.s32.totalorder %s102, %s103
    %p112 = scmp.eq.s32.totalorder %s15, 0
    %p113 = por %p111, %p112
    %p114 = scmp.ne.s32.totalorder %s102, %s103
    %p115 = scmp.eq.s32.totalorder %s16, 1
    %p116 = por %p114, %p115
    %p118 = scmp.ne.s32.totalorder %s103, %s117
    %p119 = scmp.eq.s32.totalorder %s16, 0
    %p120 = por %p118, %p119
    %s121 = ssub.s32 %s17, %s29
    %s122 = ssub.s32 %s18, %s25
    %s123 = sor.u32 %s121, %s122
    %p124 = scmp.eq.s32.totalorder %s123, 0
    %s126 = sadd.s32 %s125, 1
    %s127 = scalar_select %p124, %s125, %s126
    %p130 = pneg %p124
    %p131 = scmp.eq.s32.totalorder %s10, 1
    %p132 = por %p130, %p131
    %p133 = scmp.ne.s32.totalorder %s125, %s128
    %p134 = scmp.eq.s32.totalorder %s10, 0
    %p135 = por %p133, %p134
    %p136 = scmp.ne.s32.totalorder %s125, %s128
    %p137 = scmp.eq.s32.totalorder %s15, 1
    %p138 = por %p136, %p137
    %p139 = scmp.ne.s32.totalorder %s128, %s129
    %p140 = scmp.eq.s32.totalorder %s15, 0
    %p141 = por %p139, %p140
    %p142 = scmp.ne.s32.totalorder %s128, %s129
    %p143 = scmp.eq.s32.totalorder %s16, 1
    %p144 = por %p142, %p143
    %p146 = scmp.ne.s32.totalorder %s129, %s145
    %p147 = scmp.eq.s32.totalorder %s16, 0
    %p148 = por %p146, %p147
    %p149 = scmp.le.s32.totalorder 1, %s10
    %p150 = scmp.lt.s32.totalorder %s10, 3
    %p151 = pnand %p149, %p150
    %p152 = pneg %p151
    // Predicated region
    $region9: #{projection_head_forward.1} parent=5 // pred_check
      _
    $region10: #{projection_head_forward.1} parent=5 // pred_check_branch
      %154 = sbr.rel (%p151) target = $region12
    $region11: #{projection_head_forward.1} parent=5 // pred_region
      %s155 = ssub.s32 %s10, 1
      // Predicated region
      $region13: #{projection_head_forward.1} parent=11 // pred_check
        %p156 = pneg %p71
      $region14: #{projection_head_forward.1} parent=11 // pred_check_branch
        %158 = sbr.rel (%p156) target = $region16
      $region15: #{projection_head_forward.1} parent=11 // pred_region
        _
      $region16: #{projection_head_forward.1} parent=11 // pred_fallthru
        _
      // Predicated region
      $region17: #{projection_head_forward.1} parent=11 // pred_check
        %p159 = pneg %p92
      $region18: #{projection_head_forward.1} parent=11 // pred_check_branch
        %161 = sbr.rel (%p159) target = $region20
      $region19: #{projection_head_forward.1} parent=11 // pred_region
        _
      $region20: #{projection_head_forward.1} parent=11 // pred_fallthru
        _
      // Predicated region
      $region21: #{projection_head_forward.1} parent=11 // pred_check
        %p162 = pneg %p113
      $region22: #{projection_head_forward.1} parent=11 // pred_check_branch
        %164 = sbr.rel (%p162) target = $region24
      $region23: #{projection_head_forward.1} parent=11 // pred_region
        _
      $region24: #{projection_head_forward.1} parent=11 // pred_fallthru
        _
    $region12: #{projection_head_forward.1} parent=5 // pred_fallthru
      _
    %p165 = scmp.lt.s32.totalorder %s10, 2
    // Predicated region
    $region25: #{projection_head_forward.1} parent=5 // pred_check
      %p166 = pneg %p165
    $region26: #{projection_head_forward.1} parent=5 // pred_check_branch
      %168 = sbr.rel (%p166) target = $region28
    $region27: #{projection_head_forward.1} parent=5 // pred_region
      // Predicated region
      $region29: #{projection_head_forward.1} parent=27 // pred_check
        %p169 = pneg %p44
      $region30: #{projection_head_forward.1} parent=27 // pred_check_branch
        %171 = sbr.rel (%p169) target = $region32
      $region31: #{projection_head_forward.1} parent=27 // pred_region
        %s172 = smul.u32 2, %s18
        %p173 = scmp.lt.s32.totalorder %s17, 1
        %s174 = scalar_select %p173, %s17, 1
        %p175 = scmp.lt.s32.totalorder %s172, 1
        %s176 = scalar_select %p175, %s172, 1
        %s177 = smul.addr %s174, 8
        %s178 = sadd.s32 %s176, %s177
        %s179 = smul.addr %s178, 8
        %s180 = scalar_lea.vmem %s0, %s179
        %s181 = smul.u32 2, %s18
      $region32: #{projection_head_forward.1} parent=27 // pred_fallthru
        _
    $region28: #{projection_head_forward.1} parent=5 // pred_fallthru
      _
    %p182 = scmp.le.s32.totalorder 1, %s10
    %p183 = scmp.lt.s32.totalorder %s10, 3
    %p184 = pnand %p182, %p183
    %p185 = pneg %p184
    // Predicated region
    $region33: #{projection_head_forward.1} parent=5 // pred_check
      _
    $region34: #{projection_head_forward.1} parent=5 // pred_check_branch
      %187 = sbr.rel (%p184) target = $region36
    $region35: #{projection_head_forward.1} parent=5 // pred_region
      %s188 = ssub.s32 %s10, 1
      %s189 = smul.u32 2, %s20
      %p190 = scmp.lt.s32.totalorder %s19, 1
      %s191 = scalar_select %p190, %s19, 1
      %p192 = scmp.lt.s32.totalorder %s189, 1
      %s193 = scalar_select %p192, %s189, 1
      %s194 = smul.addr %s191, 8
      %s195 = sadd.s32 %s193, %s194
      %s196 = smul.addr %s195, 8
      %s197 = scalar_lea.vmem %s0, %s196
      %p198 = pneg %p50
      %p199 = pneg %p47
      %p200 = pneg %p71
      %p201 = pneg %p68
      %p202 = pneg %p92
      %p203 = pneg %p89
      %p204 = pneg %p113
      %p205 = pneg %p110
      %p206 = pneg %p141
      %p207 = pneg %p138
      %s208 = smul.u32 2, %s20
      %p209 = scmp.lt.s32.totalorder %s19, 1
      %s210 = scalar_select %p209, %s19, 1
      %p211 = scmp.lt.s32.totalorder %s208, 1
      %s212 = scalar_select %p211, %s208, 1
      %s213 = smul.addr %s210, 16
      %s214 = sadd.s32 %s212, %s213
      %s215 = smul.addr %s214, 8
      %s216 = scalar_lea.vmem %s4, %s215
      %s217 = smul.u32 2, %s20
      %p218 = scmp.lt.s32.totalorder %s19, 1
      %s219 = scalar_select %p218, %s19, 1
      %p220 = scmp.lt.s32.totalorder %s217, 1
      %s221 = scalar_select %p220, %s217, 1
      %s222 = smul.addr %s219, 8
      %s223 = sadd.s32 %s221, %s222
      %s224 = smul.addr %s223, 8
      %s225 = scalar_lea.vmem %s0, %s224
      %s226 = smul.u32 2, %s20
      %s227 = smul.u32 2, %s20
      %p228 = scmp.lt.s32.totalorder %s19, 1
      %s229 = scalar_select %p228, %s19, 1
      %p230 = scmp.lt.s32.totalorder %s227, 1
      %s231 = scalar_select %p230, %s227, 1
      %s232 = smul.addr %s229, 16
      %s233 = sadd.s32 %s231, %s232
      %s234 = smul.addr %s233, 8
      %s235 = scalar_lea.vmem %s4, %s234
      %s236 = smul.u32 2, %s20
      %v237 = vld [vmem:[%s1] sm:$0xff]
      %v238 = vld [vmem:[%s1 + $0x8] sm:$0xff]
      %v239 = vld [vmem:[%s1 + $0x10] sm:$0xff]
      %v240 = vld [vmem:[%s1 + $0x18] sm:$0xff]
      %v241 = vld [vmem:[%s225] sm:$0xff]
      %v242 = vld [vmem:[%s225 + $0x8] sm:$0xff]
      %v243 = vld [vmem:[%s225 + $0x10] sm:$0xff]
      %v244 = vld [vmem:[%s225 + $0x18] sm:$0xff]
      %v245 = vld [vmem:[%s225 + $0x20] sm:$0xff]
      %v246 = vld [vmem:[%s225 + $0x28] sm:$0xff]
      %v247 = vld [vmem:[%s225 + $0x30] sm:$0xff]
      %v248 = vld [vmem:[%s225 + $0x38] sm:$0xff]
      %v249 = vld [vmem:[%s2] sm:$0xff]
      %v250 = vld [vmem:[%s2 + $0x8] sm:$0xff]
      %v251 = vld [vmem:[%s2 + $0x10] sm:$0xff]
      %v252 = vld [vmem:[%s2 + $0x18] sm:$0xff]
      %254 = vset.pattern.permute.xlu0 0
      %255 = vperm.xlu0 %254, %v249
      %v256 = vpop.permute.xlu0 %255
      %259 = vset.pattern.permute.xlu0 0
      %260 = vperm.xlu0 %259, %v250
      %v261 = vpop.permute.xlu0 %260
      %264 = vset.pattern.permute.xlu0 0
      %265 = vperm.xlu0 %264, %v251
      %v266 = vpop.permute.xlu0 %265
      %269 = vset.pattern.permute.xlu0 0
      %270 = vperm.xlu0 %269, %v252
      %v271 = vpop.permute.xlu0 %270
      %vm273 = vcmask 261120
      %v275 = vsel %vm273, %v237, 0
      %v278 = vsel %vm273, %v238, 0
      %v281 = vsel %vm273, %v239, 0
      %v284 = vsel %vm273, %v240, 0
      %286 = vmatpush.msra.mxu0 0.0
      %287 = vmatpush.msra.mxu0 0.0
      %288 = vmatpush.msra.mxu0 0.0
      %289 = vmatpush.msra.mxu0 0.0
      %290 = vmatpush.msra.mxu0 0.0
      %291 = vmatpush.msra.mxu0 0.0
      %292 = vmatpush.msra.mxu0 0.0
      %293 = vmatpush.msra.mxu0 0.0
      %294 = vmatpush.msra.mxu0 0.0
      %295 = vmatpush.msra.mxu0 0.0
      %296 = vmatpush.msra.mxu0 0.0
      %297 = vmatpush.msra.mxu0 0.0
      %298 = vmatpush.msra.mxu0 %v247
      %299 = vmatpush.msra.mxu0 %v245
      %300 = vmatpush.msra.mxu0 %v243
      %301 = vmatpush.msra.mxu0 %v241
      %302 = vmatmul.f32.gmra.mxu0 %v275
      %v303 = vpop.f32.mrf.mxu0
      %v304 = vadd.f32 %v256, %v303
      %305 = vmatmul.f32.gmra.mxu0 %v278
      %v306 = vpop.f32.mrf.mxu0
      %v307 = vadd.f32 %v261, %v306
      %308 = vmatmul.f32.gmra.mxu0 %v281
      %v309 = vpop.f32.mrf.mxu0
      %v310 = vadd.f32 %v266, %v309
      %311 = vmatmul.f32.gmra.mxu0 %v284
      %v312 = vpop.f32.mrf.mxu0
      %v313 = vadd.f32 %v271, %v312
      %314 = vdwg.mxu0
      %315 = vmatpush.msra.mxu0 0.0
      %316 = vmatpush.msra.mxu0 0.0
      %317 = vmatpush.msra.mxu0 0.0
      %318 = vmatpush.msra.mxu0 0.0
      %319 = vmatpush.msra.mxu0 0.0
      %320 = vmatpush.msra.mxu0 0.0
      %321 = vmatpush.msra.mxu0 0.0
      %322 = vmatpush.msra.mxu0 0.0
      %323 = vmatpush.msra.mxu0 0.0
      %324 = vmatpush.msra.mxu0 0.0
      %325 = vmatpush.msra.mxu0 0.0
      %326 = vmatpush.msra.mxu0 0.0
      %327 = vmatpush.msra.mxu0 %v248
      %328 = vmatpush.msra.mxu0 %v246
      %329 = vmatpush.msra.mxu0 %v244
      %330 = vmatpush.msra.mxu0 %v242
      %331 = vmatmul.f32.gmra.mxu0 %v275
      %v332 = vpop.f32.mrf.mxu0
      %v333 = vadd.f32 %v256, %v332
      %334 = vmatmul.f32.gmra.mxu0 %v278
      %v335 = vpop.f32.mrf.mxu0
      %v336 = vadd.f32 %v261, %v335
      %337 = vmatmul.f32.gmra.mxu0 %v281
      %v338 = vpop.f32.mrf.mxu0
      %v339 = vadd.f32 %v266, %v338
      %340 = vmatmul.f32.gmra.mxu0 %v284
      %v341 = vpop.f32.mrf.mxu0
      %v342 = vadd.f32 %v271, %v341
      %343 = vdwg.mxu0
      %v344 = vmax.f32 %v304, 0.0
      %v345 = vmax.f32 %v333, 0.0
      %v346 = vmax.f32 %v307, 0.0
      %v347 = vmax.f32 %v336, 0.0
      %v348 = vmax.f32 %v310, 0.0
      %v349 = vmax.f32 %v339, 0.0
      %v350 = vmax.f32 %v313, 0.0
      %v351 = vmax.f32 %v342, 0.0
      %v352 = vld [vmem:[%s3] sm:$0xff]
      %v353 = vld [vmem:[%s3 + $0x8] sm:$0xff]
      %v354 = vld [vmem:[%s3 + $0x10] sm:$0xff]
      %v355 = vld [vmem:[%s3 + $0x18] sm:$0xff]
      %v356 = vld [vmem:[%s3 + $0x20] sm:$0xff]
      %v357 = vld [vmem:[%s3 + $0x28] sm:$0xff]
      %v358 = vld [vmem:[%s3 + $0x30] sm:$0xff]
      %v359 = vld [vmem:[%s3 + $0x38] sm:$0xff]
      %v361 = vsel %vm273, %v352, 0
      %v364 = vsel %vm273, %v353, 0
      %v367 = vsel %vm273, %v354, 0
      %v370 = vsel %vm273, %v355, 0
      %v373 = vsel %vm273, %v356, 0
      %v376 = vsel %vm273, %v357, 0
      %v379 = vsel %vm273, %v358, 0
      %v382 = vsel %vm273, %v359, 0
      %384 = vmatpush.msra.mxu0 0.0
      %385 = vmatpush.msra.mxu0 0.0
      %386 = vmatpush.msra.mxu0 0.0
      %387 = vmatpush.msra.mxu0 0.0
      %388 = vmatpush.msra.mxu0 0.0
      %389 = vmatpush.msra.mxu0 0.0
      %390 = vmatpush.msra.mxu0 0.0
      %391 = vmatpush.msra.mxu0 0.0
      %392 = vmatpush.msra.mxu0 0.0
      %393 = vmatpush.msra.mxu0 0.0
      %394 = vmatpush.msra.mxu0 0.0
      %395 = vmatpush.msra.mxu0 0.0
      %396 = vmatpush.msra.mxu0 %v350
      %397 = vmatpush.msra.mxu0 %v348
      %398 = vmatpush.msra.mxu0 %v346
      %399 = vmatpush.msra.mxu0 %v344
      %400 = vmatmul.f32.gmra.mxu0 %v361
      %v401 = vpop.f32.mrf.mxu0
      %v402 = vadd.f32 0.0, %v401
      %403 = vmatmul.f32.gmra.mxu0 %v364
      %v404 = vpop.f32.mrf.mxu0
      %v405 = vadd.f32 0.0, %v404
      %406 = vmatmul.f32.gmra.mxu0 %v367
      %v407 = vpop.f32.mrf.mxu0
      %v408 = vadd.f32 0.0, %v407
      %409 = vmatmul.f32.gmra.mxu0 %v370
      %v410 = vpop.f32.mrf.mxu0
      %v411 = vadd.f32 0.0, %v410
      %412 = vmatmul.f32.gmra.mxu0 %v373
      %v413 = vpop.f32.mrf.mxu0
      %v414 = vadd.f32 0.0, %v413
      %415 = vmatmul.f32.gmra.mxu0 %v376
      %v416 = vpop.f32.mrf.mxu0
      %v417 = vadd.f32 0.0, %v416
      %418 = vmatmul.f32.gmra.mxu0 %v379
      %v419 = vpop.f32.mrf.mxu0
      %v420 = vadd.f32 0.0, %v419
      %421 = vmatmul.f32.gmra.mxu0 %v382
      %v422 = vpop.f32.mrf.mxu0
      %v423 = vadd.f32 0.0, %v422
      %424 = vdwg.mxu0
      %425 = vmatpush.msra.mxu0 0.0
      %426 = vmatpush.msra.mxu0 0.0
      %427 = vmatpush.msra.mxu0 0.0
      %428 = vmatpush.msra.mxu0 0.0
      %429 = vmatpush.msra.mxu0 0.0
      %430 = vmatpush.msra.mxu0 0.0
      %431 = vmatpush.msra.mxu0 0.0
      %432 = vmatpush.msra.mxu0 0.0
      %433 = vmatpush.msra.mxu0 0.0
      %434 = vmatpush.msra.mxu0 0.0
      %435 = vmatpush.msra.mxu0 0.0
      %436 = vmatpush.msra.mxu0 0.0
      %437 = vmatpush.msra.mxu0 %v351
      %438 = vmatpush.msra.mxu0 %v349
      %439 = vmatpush.msra.mxu0 %v347
      %440 = vmatpush.msra.mxu0 %v345
      %441 = vmatmul.f32.gmra.mxu0 %v361
      %v442 = vpop.f32.mrf.mxu0
      %v443 = vadd.f32 0.0, %v442
      %444 = vmatmul.f32.gmra.mxu0 %v364
      %v445 = vpop.f32.mrf.mxu0
      %v446 = vadd.f32 0.0, %v445
      %447 = vmatmul.f32.gmra.mxu0 %v367
      %v448 = vpop.f32.mrf.mxu0
      %v449 = vadd.f32 0.0, %v448
      %450 = vmatmul.f32.gmra.mxu0 %v370
      %v451 = vpop.f32.mrf.mxu0
      %v452 = vadd.f32 0.0, %v451
      %453 = vmatmul.f32.gmra.mxu0 %v373
      %v454 = vpop.f32.mrf.mxu0
      %v455 = vadd.f32 0.0, %v454
      %456 = vmatmul.f32.gmra.mxu0 %v376
      %v457 = vpop.f32.mrf.mxu0
      %v458 = vadd.f32 0.0, %v457
      %459 = vmatmul.f32.gmra.mxu0 %v379
      %v460 = vpop.f32.mrf.mxu0
      %v461 = vadd.f32 0.0, %v460
      %462 = vmatmul.f32.gmra.mxu0 %v382
      %v463 = vpop.f32.mrf.mxu0
      %v464 = vadd.f32 0.0, %v463
      %465 = vdwg.mxu0
      %v466 = vmul.f32 %v402, %v402
      %v467 = vmul.f32 %v443, %v443
      %v468 = vmul.f32 %v405, %v405
      %v469 = vmul.f32 %v446, %v446
      %v470 = vmul.f32 %v408, %v408
      %v471 = vmul.f32 %v449, %v449
      %v472 = vmul.f32 %v411, %v411
      %v473 = vmul.f32 %v452, %v452
      %v474 = vmul.f32 %v414, %v414
      %v475 = vmul.f32 %v455, %v455
      %v476 = vmul.f32 %v417, %v417
      %v477 = vmul.f32 %v458, %v458
      %v478 = vmul.f32 %v420, %v420
      %v479 = vmul.f32 %v461, %v461
      %v480 = vmul.f32 %v423, %v423
      %v481 = vmul.f32 %v464, %v464
      %v482 = vadd.f32 %v466, %v468
      %v483 = vadd.f32 %v482, %v470
      %v484 = vadd.f32 %v483, %v472
      %v485 = vadd.f32 %v484, %v474
      %v486 = vadd.f32 %v485, %v476
      %v487 = vadd.f32 %v486, %v478
      %v488 = vadd.f32 %v487, %v480
      %v489 = vrot.slane %v488, 4
      %v490 = vadd.f32 %v488, %v489
      %v491 = vrot.slane %v490, 2
      %v492 = vadd.f32 %v490, %v491
      %v493 = vrot.slane %v492, 1
      %v494 = vadd.f32 %v492, %v493
      %v495 = vadd.f32 %v467, %v469
      %v496 = vadd.f32 %v495, %v471
      %v497 = vadd.f32 %v496, %v473
      %v498 = vadd.f32 %v497, %v475
      %v499 = vadd.f32 %v498, %v477
      %v500 = vadd.f32 %v499, %v479
      %v501 = vadd.f32 %v500, %v481
      %v502 = vrot.slane %v501, 4
      %v503 = vadd.f32 %v501, %v502
      %v504 = vrot.slane %v503, 2
      %v505 = vadd.f32 %v503, %v504
      %v506 = vrot.slane %v505, 1
      %v507 = vadd.f32 %v505, %v506
      %v508 = vmax.f32 %v494, 1e-24
      %v509 = vmax.f32 %v507, 1e-24
      %v510 = vrsqrt.pop %v508
      %v511 = vmul.f32 %v510, %v508
      %v512 = vmul.f32 %v511, %v510
      %v513 = vmul.f32 0.5, %v512
      %v514 = vsub.f32 1.5, %v513
      %v515 = vmul.f32 %v510, %v514
      %vm516 = vweird.f32 %v508
      %vm517 = vweird.f32 %v510
      %vm518 = vmor %vm516, %vm517
      %v519 = vsel %vm518, %v510, %v515
      %v520 = vrsqrt.pop %v509
      %v521 = vmul.f32 %v520, %v509
      %v522 = vmul.f32 %v521, %v520
      %v523 = vmul.f32 0.5, %v522
      %v524 = vsub.f32 1.5, %v523
      %v525 = vmul.f32 %v520, %v524
      %vm526 = vweird.f32 %v509
      %vm527 = vweird.f32 %v520
      %vm528 = vmor %vm526, %vm527
      %v529 = vsel %vm528, %v520, %v525
      %v530 = vmul.f32 %v402, %v519
      %v531 = vmul.f32 %v443, %v529
      %v532 = vmul.f32 %v405, %v519
      %v533 = vmul.f32 %v446, %v529
      %v534 = vmul.f32 %v408, %v519
      %v535 = vmul.f32 %v449, %v529
      %v536 = vmul.f32 %v411, %v519
      %v537 = vmul.f32 %v452, %v529
      %v538 = vmul.f32 %v414, %v519
      %v539 = vmul.f32 %v455, %v529
      %v540 = vmul.f32 %v417, %v519
      %v541 = vmul.f32 %v458, %v529
      %v542 = vmul.f32 %v420, %v519
      %v543 = vmul.f32 %v461, %v529
      %v544 = vmul.f32 %v423, %v519
      %v545 = vmul.f32 %v464, %v529
      %546 = vst [vmem:[%s235] sm:$0xff] %v530
      %547 = vst [vmem:[%s235 + $0x8] sm:$0xff] %v531
      %548 = vst [vmem:[%s235 + $0x10] sm:$0xff] %v532
      %549 = vst [vmem:[%s235 + $0x18] sm:$0xff] %v533
      %550 = vst [vmem:[%s235 + $0x20] sm:$0xff] %v534
      %551 = vst [vmem:[%s235 + $0x28] sm:$0xff] %v535
      %552 = vst [vmem:[%s235 + $0x30] sm:$0xff] %v536
      %553 = vst [vmem:[%s235 + $0x38] sm:$0xff] %v537
      %554 = vst [vmem:[%s235 + $0x40] sm:$0xff] %v538
      %555 = vst [vmem:[%s235 + $0x48] sm:$0xff] %v539
      %556 = vst [vmem:[%s235 + $0x50] sm:$0xff] %v540
      %557 = vst [vmem:[%s235 + $0x58] sm:$0xff] %v541
      %558 = vst [vmem:[%s235 + $0x60] sm:$0xff] %v542
      %559 = vst [vmem:[%s235 + $0x68] sm:$0xff] %v543
      %560 = vst [vmem:[%s235 + $0x70] sm:$0xff] %v544
      %561 = vst [vmem:[%s235 + $0x78] sm:$0xff] %v545
      %s562 = smul.u32 2, %s20
      %p563 = scmp.lt.s32.totalorder %s19, 1
      %s564 = scalar_select %p563, %s19, 1
      %p565 = scmp.lt.s32.totalorder %s562, 1
      %s566 = scalar_select %p565, %s562, 1
      %s567 = smul.addr %s564, 16
      %s568 = sadd.s32 %s566, %s567
      %s569 = smul.addr %s568, 8
      %s570 = scalar_lea.vmem %s4, %s569
      // Predicated region
      $region37: #{projection_head_forward.1} parent=35 // pred_check
        %p571 = pneg %p138
      $region38: #{projection_head_forward.1} parent=35 // pred_check_branch
        %573 = sbr.rel (%p571) target = $region40
      $region39: #{projection_head_forward.1} parent=35 // pred_region
        %s574 = smul.u32 2, %s20
      $region40: #{projection_head_forward.1} parent=35 // pred_fallthru
        _
    $region36: #{projection_head_forward.1} parent=5 // pred_fallthru
      _
    %p575 = scmp.le.s32.totalorder 2, %s10
    // Predicated region
    $region41: #{projection_head_forward.1} parent=5 // pred_check
      %p576 = pneg %p575
    $region42: #{projection_head_forward.1} parent=5 // pred_check_branch
      %578 = sbr.rel (%p576) target = $region44
    $region43: #{projection_head_forward.1} parent=5 // pred_region
      %s579 = ssub.s32 %s10, 2
      // Predicated region
      $region45: #{projection_head_forward.1} parent=43 // pred_check
        %p580 = pneg %p144
      $region46: #{projection_head_forward.1} parent=43 // pred_check_branch
        %582 = sbr.rel (%p580) target = $region48
      $region47: #{projection_head_forward.1} parent=43 // pred_region
        %s583 = smul.u32 2, %s22
        %p584 = scmp.lt.s32.totalorder %s21, 1
        %s585 = scalar_select %p584, %s21, 1
        %p586 = scmp.lt.s32.totalorder %s583, 1
        %s587 = scalar_select %p586, %s583, 1
        %s588 = smul.addr %s585, 16
        %s589 = sadd.s32 %s587, %s588
        %s590 = smul.addr %s589, 8
        %s591 = scalar_lea.vmem %s4, %s590
      $region48: #{projection_head_forward.1} parent=43 // pred_fallthru
        _
    $region44: #{projection_head_forward.1} parent=5 // pred_fallthru
      _
  $region6: #{projection_head_forward.1} parent=0 // loop_footer
    %s14 = sadd.s32 1, %s10
  $region7: #{projection_head_forward.1} parent=0 // loop_footer_branch
    %9 = sbr.rel target = $region3
  $region8: #{projection_head_forward.1} parent=0 // loop_exit
    _

</llo_original>
